<compile_context>
chip_gen: v6e
topology: v6e:2x2x1
jax: 0.10.0
libtpu: 0.0.40
codegen_flags: <defaults>
</compile_context>

<pallas_src>
import functools

import jax
import jax.numpy as jnp
from jax.experimental import pallas as pl
from jax.experimental.pallas import tpu as pltpu

LANE = 128
SUBLANE = 8


def _round_up(x, m):
    return (x + m - 1) // m * m


# ------------------------------ Pallas kernel --------------------------------

def _lstm_fc_kernel(x_ref, wig_ref, bg_ref, wfc_ref, bfc_ref, o_ref, *, hidden):
    # x_ref:   (tm, Din)   bf16  batch-row tile of inputs
    # wig_ref: (Din, 3H)   bf16  W_ih^T packed as [i, g, o] (forget gate dropped)
    # bg_ref:  (1, 3H)     f32   (b_ih + b_hh) packed as [i, g, o]
    # wfc_ref: (H, Npad)   bf16  W_fc^T, zero-padded to lane width
    # bfc_ref: (1, Npad)   f32   b_fc, zero-padded
    # o_ref:   (tm, Npad)  bf16  logits (padded lanes)
    gates = jnp.dot(x_ref[...], wig_ref[...],
                    preferred_element_type=jnp.float32) + bg_ref[...]
    h = hidden
    # sigmoid(x) = 0.5 * (tanh(0.5 * x) + 1): one transcendental per sigmoid.
    i_g = 0.5 * (jnp.tanh(0.5 * gates[:, 0 * h:1 * h]) + 1.0)
    g_g = jnp.tanh(gates[:, 1 * h:2 * h])
    o_g = 0.5 * (jnp.tanh(0.5 * gates[:, 2 * h:3 * h]) + 1.0)
    c = i_g * g_g                       # forget gate * c0 == 0 already dropped
    hid = o_g * jnp.tanh(c)
    logits = jnp.dot(hid.astype(wfc_ref.dtype), wfc_ref[...],
                     preferred_element_type=jnp.float32) + bfc_ref[...]
    o_ref[...] = logits.astype(o_ref.dtype)


# --------------------------- One-time weight packing --------------------------

def prepare_params(params):
    """Host-side, one-time packing of LSTM + FC weights for the kernel."""
    h4, d_in = params["w_ih"].shape
    H = h4 // 4
    C = params["w_fc"].shape[0]
    n_pad = _round_up(max(C, LANE), LANE)

    # PyTorch gate row order is [i, f, g, o]; forget gate is inert (c0 == 0).
    w_igo = jnp.concatenate(
        [params["w_ih"][0:H], params["w_ih"][2 * H:4 * H]], axis=0
    ).T.astype(jnp.bfloat16)                                        # (Din, 3H)
    b = params["b_ih"] + params["b_hh"]
    b_igo = jnp.concatenate(
        [b[0:H], b[2 * H:4 * H]]).reshape(1, 3 * H).astype(jnp.float32)
    w_fc_t = jnp.zeros((H, n_pad), jnp.bfloat16).at[:, :C].set(
        params["w_fc"].T.astype(jnp.bfloat16))                      # (H, Npad)
    b_fc_p = jnp.zeros((1, n_pad), jnp.float32).at[:, :C].set(
        params["b_fc"].astype(jnp.float32))
    return dict(w_igo=w_igo, b_igo=b_igo, w_fc_t=w_fc_t, b_fc_p=b_fc_p)


# ------------------------------ Forward wrapper -------------------------------

def lstm_classifier_forward(x, packed, *, num_classes, tm_max=1024):
    """x: (B, input_size) f32, packed: prepare_params() output -> (B, C) f32."""
    B, d_in = x.shape
    w_igo, b_igo = packed["w_igo"], packed["b_igo"]
    w_fc_t, b_fc_p = packed["w_fc_t"], packed["b_fc_p"]
    H3 = w_igo.shape[1]
    H = H3 // 3
    n_pad = w_fc_t.shape[1]

    # Batch-row tiling: pad B to the sublane granule; cap the tile at tm_max
    # (footprint at tm=1024 is ~6-8 MiB, far below every generation's VMEM).
    b_pad = _round_up(B, SUBLANE)
    if b_pad > tm_max:
        tm = tm_max
        b_pad = _round_up(b_pad, tm)
    elif b_pad >= 2 * SUBLANE:
        # Always give the "parallel" grid axis >= 2 steps so v7x megacore
        # (2 TensorCores) can split the work.
        tm = _round_up(pl.cdiv(b_pad, 2), SUBLANE)
        b_pad = _round_up(b_pad, tm)
    else:
        tm = b_pad

    x_p = jnp.zeros((b_pad, d_in), jnp.bfloat16).at[:B].set(x.astype(jnp.bfloat16))

    grid = (b_pad // tm,)
    out = pl.pallas_call(
        functools.partial(_lstm_fc_kernel, hidden=H),
        out_shape=jax.ShapeDtypeStruct((b_pad, n_pad), jnp.bfloat16),
        grid=grid,
        in_specs=[
            pl.BlockSpec((tm, d_in), lambda i: (i, 0)),      # x rows (tiled)
            pl.BlockSpec((d_in, H3), lambda i: (0, 0)),      # W_ih^T[i,g,o] (resident)
            pl.BlockSpec((1, H3), lambda i: (0, 0)),         # fused gate bias
            pl.BlockSpec((H, n_pad), lambda i: (0, 0)),      # W_fc^T (resident)
            pl.BlockSpec((1, n_pad), lambda i: (0, 0)),      # fc bias
        ],
        out_specs=pl.BlockSpec((tm, n_pad), lambda i: (i, 0)),
        compiler_params=pltpu.CompilerParams(
            dimension_semantics=("parallel",),               # megacore on v7x
            vmem_limit_bytes=32 * 1024 * 1024,
        ),
    )(x_p, w_igo, b_igo, w_fc_t, b_fc_p)

    return out[:B, :num_classes].astype(jnp.float32)


# --------------------------- Reference (pure JAX) -----------------------------

def lstm_classifier_reference(x, params):
    H = params["w_ih"].shape[0] // 4
    gates = x @ params["w_ih"].T + params["b_ih"] + params["b_hh"]
    i = jax.nn.sigmoid(gates[:, 0 * H:1 * H])
    g = jnp.tanh(gates[:, 2 * H:3 * H])
    o = jax.nn.sigmoid(gates[:, 3 * H:4 * H])
    c = i * g
    h = o * jnp.tanh(c)
    return h @ params["w_fc"].T + params["b_fc"]


# ------------------------- Deterministic parameters ---------------------------

def init_params(key, input_size=512, hidden_size=128, num_classes=2):
    ks = jax.random.split(key, 6)
    b = 1.0 / (hidden_size ** 0.5)          # PyTorch LSTM / Linear default init
    w_ih = jax.random.uniform(ks[0], (4 * hidden_size, input_size), jnp.float32, -b, b)
    w_hh = jax.random.uniform(ks[1], (4 * hidden_size, hidden_size), jnp.float32, -b, b)
    b_ih = jax.random.uniform(ks[2], (4 * hidden_size,), jnp.float32, -b, b)
    b_hh = jax.random.uniform(ks[3], (4 * hidden_size,), jnp.float32, -b, b)
    w_fc = jax.random.uniform(ks[4], (num_classes, hidden_size), jnp.float32, -b, b)
    b_fc = jax.random.uniform(ks[5], (num_classes,), jnp.float32, -b, b)
    # w_hh is kept for parameter fidelity but is mathematically inert here
    # (seq_len == 1 and h0 == 0); only b_hh contributes.
    return dict(w_ih=w_ih, w_hh=w_hh, b_ih=b_ih, b_hh=b_hh, w_fc=w_fc, b_fc=b_fc)


# ---------------------------------- Main ---------------------------------------

if __name__ == "__main__":
    key = jax.random.PRNGKey(0)
    kp, kx, kx2 = jax.random.split(key, 3)
    params = init_params(kp)                        # input=512, hidden=128, classes=2
    packed = prepare_params(params)                 # one-time weight packing
    packed = jax.tree_util.tree_map(jax.block_until_ready, packed)

    fwd = jax.jit(lstm_classifier_forward, static_argnames=("num_classes", "tm_max"))

    # Primary test: the module's natural small shape (batch=2, input_size=512).
    x = jax.random.normal(kx, (2, 512), jnp.float32)
    out = jax.block_until_ready(fwd(x, packed, num_classes=2))
    assert out.shape == (2, 2), out.shape
    assert bool(jnp.all(jnp.isfinite(out)))
    ref = lstm_classifier_reference(x, params)
    assert bool(jnp.allclose(out, ref, atol=2e-2, rtol=2e-2)), (out, ref)

    # Secondary test: exercise row padding and a >=2-step (megacore) grid.
    x2 = jax.random.normal(kx2, (40, 512), jnp.float32)
    out2 = jax.block_until_ready(fwd(x2, packed, num_classes=2))
    ref2 = lstm_classifier_reference(x2, params)
    assert out2.shape == (40, 2), out2.shape
    assert bool(jnp.allclose(out2, ref2, atol=2e-2, rtol=2e-2))

    print("KERNEL_OK")
</pallas_src>

<mosaic_0001>
module attributes {stable_mosaic.version = 11 : i64} {
  func.func @_lstm_fc_kernel(%arg0: i32, %arg1: memref<8x512xbf16, #tpu.memory_space<vmem>>, %arg2: memref<512x384xbf16, #tpu.memory_space<vmem>>, %arg3: memref<1x384xf32, #tpu.memory_space<vmem>>, %arg4: memref<128x128xbf16, #tpu.memory_space<vmem>>, %arg5: memref<1x128xf32, #tpu.memory_space<vmem>>, %arg6: memref<8x128xbf16, #tpu.memory_space<vmem>>) attributes {dimension_semantics = [#tpu.dimension_semantics<parallel>], iteration_bounds = array<i64: 1>, scalar_prefetch = 0 : i64, scratch_operands = 0 : i64, tpu.core_type = #tpu.core_type<tc>, window_params = [{transform_indices = @transform_0, window_bounds = array<i64: 8, 512>}, {pipeline_mode = #tpu.pipeline_mode<synchronous>, transform_indices = @transform_1, window_bounds = array<i64: 512, 384>}, {pipeline_mode = #tpu.pipeline_mode<synchronous>, transform_indices = @transform_2, window_bounds = array<i64: 1, 384>}, {pipeline_mode = #tpu.pipeline_mode<synchronous>, transform_indices = @transform_3, window_bounds = array<i64: 128, 128>}, {pipeline_mode = #tpu.pipeline_mode<synchronous>, transform_indices = @transform_4, window_bounds = array<i64: 1, 128>}, {transform_indices = @transform_5, window_bounds = array<i64: 8, 128>}]} {
    %c0 = arith.constant 0 : index
    %c0_0 = arith.constant 0 : index
    %0 = vector.load %arg1[%c0, %c0_0] : memref<8x512xbf16, #tpu.memory_space<vmem>>, vector<8x512xbf16>
    %c0_1 = arith.constant 0 : index
    %c0_2 = arith.constant 0 : index
    %1 = vector.load %arg2[%c0_1, %c0_2] : memref<512x384xbf16, #tpu.memory_space<vmem>>, vector<512x384xbf16>
    %cst = arith.constant dense<0.000000e+00> : vector<8x384xf32>
    %2 = tpu.matmul %0, %1, %cst {dimension_numbers = #tpu.dot_dimension_numbers<[1], [0], [0], [1], [0, 0, 1, 1], [], []>} : vector<8x512xbf16>, vector<512x384xbf16>, vector<8x384xf32> -> vector<8x384xf32>
    %c0_3 = arith.constant 0 : index
    %c0_4 = arith.constant 0 : index
    %3 = vector.load %arg3[%c0_3, %c0_4] : memref<1x384xf32, #tpu.memory_space<vmem>>, vector<1x384xf32>
    %4 = vector.broadcast %3 : vector<1x384xf32> to vector<8x384xf32>
    %5 = arith.addf %2, %4 : vector<8x384xf32>
    %6 = vector.extract_strided_slice %5 {offsets = [0, 0], sizes = [8, 128], strides = [1, 1]} : vector<8x384xf32> to vector<8x128xf32>
    %cst_5 = arith.constant 5.000000e-01 : f32
    %7 = vector.broadcast %cst_5 : f32 to vector<8x128xf32>
    %8 = arith.mulf %7, %6 : vector<8x128xf32>
    %9 = math.tanh %8 : vector<8x128xf32>
    %cst_6 = arith.constant 1.000000e+00 : f32
    %10 = vector.broadcast %cst_6 : f32 to vector<8x128xf32>
    %11 = arith.addf %9, %10 : vector<8x128xf32>
    %cst_7 = arith.constant 5.000000e-01 : f32
    %12 = vector.broadcast %cst_7 : f32 to vector<8x128xf32>
    %13 = arith.mulf %12, %11 : vector<8x128xf32>
    %14 = vector.extract_strided_slice %5 {offsets = [0, 128], sizes = [8, 128], strides = [1, 1]} : vector<8x384xf32> to vector<8x128xf32>
    %15 = math.tanh %14 : vector<8x128xf32>
    %16 = vector.extract_strided_slice %5 {offsets = [0, 256], sizes = [8, 128], strides = [1, 1]} : vector<8x384xf32> to vector<8x128xf32>
    %cst_8 = arith.constant 5.000000e-01 : f32
    %17 = vector.broadcast %cst_8 : f32 to vector<8x128xf32>
    %18 = arith.mulf %17, %16 : vector<8x128xf32>
    %19 = math.tanh %18 : vector<8x128xf32>
    %cst_9 = arith.constant 1.000000e+00 : f32
    %20 = vector.broadcast %cst_9 : f32 to vector<8x128xf32>
    %21 = arith.addf %19, %20 : vector<8x128xf32>
    %cst_10 = arith.constant 5.000000e-01 : f32
    %22 = vector.broadcast %cst_10 : f32 to vector<8x128xf32>
    %23 = arith.mulf %22, %21 : vector<8x128xf32>
    %24 = arith.mulf %13, %15 : vector<8x128xf32>
    %25 = math.tanh %24 : vector<8x128xf32>
    %26 = arith.mulf %23, %25 : vector<8x128xf32>
    %27 = arith.truncf %26 : vector<8x128xf32> to vector<8x128xbf16>
    %c0_11 = arith.constant 0 : index
    %c0_12 = arith.constant 0 : index
    %28 = vector.load %arg4[%c0_11, %c0_12] : memref<128x128xbf16, #tpu.memory_space<vmem>>, vector<128x128xbf16>
    %cst_13 = arith.constant dense<0.000000e+00> : vector<8x128xf32>
    %29 = tpu.matmul %27, %28, %cst_13 {dimension_numbers = #tpu.dot_dimension_numbers<[1], [0], [0], [1], [0, 0, 1, 1], [], []>} : vector<8x128xbf16>, vector<128x128xbf16>, vector<8x128xf32> -> vector<8x128xf32>
    %c0_14 = arith.constant 0 : index
    %c0_15 = arith.constant 0 : index
    %30 = vector.load %arg5[%c0_14, %c0_15] : memref<1x128xf32, #tpu.memory_space<vmem>>, vector<1x128xf32>
    %31 = vector.broadcast %30 : vector<1x128xf32> to vector<8x128xf32>
    %32 = arith.addf %29, %31 : vector<8x128xf32>
    %33 = arith.truncf %32 : vector<8x128xf32> to vector<8x128xbf16>
    %c0_16 = arith.constant 0 : index
    %c0_17 = arith.constant 0 : index
    %34 = vector.load %arg6[%c0_16, %c0_17] : memref<8x128xbf16, #tpu.memory_space<vmem>>, vector<8x128xbf16>
    tpu.vector_store %arg6[%c0_16, %c0_17], %33 {strides = array<i32>} : memref<8x128xbf16, #tpu.memory_space<vmem>>, vector<8x128xbf16>,
    return
  }
  func.func @transform_0(%arg0: i32) -> (i32, i32) {
    %c0_i32 = arith.constant 0 : i32
    %c0_i32_0 = arith.constant 0 : i32
    return %arg0, %c0_i32 : i32, i32
  }
  func.func @transform_1(%arg0: i32) -> (i32, i32) {
    %c0_i32 = arith.constant 0 : i32
    %c0_i32_0 = arith.constant 0 : i32
    %c0_i32_1 = arith.constant 0 : i32
    return %c0_i32, %c0_i32_0 : i32, i32
  }
  func.func @transform_2(%arg0: i32) -> (i32, i32) {
    %c0_i32 = arith.constant 0 : i32
    %c0_i32_0 = arith.constant 0 : i32
    %c0_i32_1 = arith.constant 0 : i32
    return %c0_i32, %c0_i32_0 : i32, i32
  }
  func.func @transform_3(%arg0: i32) -> (i32, i32) {
    %c0_i32 = arith.constant 0 : i32
    %c0_i32_0 = arith.constant 0 : i32
    %c0_i32_1 = arith.constant 0 : i32
    return %c0_i32, %c0_i32_0 : i32, i32
  }
  func.func @transform_4(%arg0: i32) -> (i32, i32) {
    %c0_i32 = arith.constant 0 : i32
    %c0_i32_0 = arith.constant 0 : i32
    %c0_i32_1 = arith.constant 0 : i32
    return %c0_i32, %c0_i32_0 : i32, i32
  }
  func.func @transform_5(%arg0: i32) -> (i32, i32) {
    %c0_i32 = arith.constant 0 : i32
    %c0_i32_0 = arith.constant 0 : i32
    return %arg0, %c0_i32 : i32, i32
  }
}

</mosaic_0001>

<llo_original>
// kernel: lstm_classifier_forward.1
$region0: #{lstm_classifier_forward.1}
  #allocation0 [shape = 'u32[]', space=smem, size = 0x4, offset = 0x4, fixed_abs, tag = 'smem constant byte address 0x4 - core index']
  #allocation1 [shape = 'u32[144,128]{1,0:T(1,128)}', space=vmem, size = 0x12000, scoped, tag = 'internal scratch']
  %s0 = inlined_call_operand.vmem [shape: bf16[8,512], index: 0, kind: input, shape index: {}]
  %s1 = inlined_call_operand.hbm [shape: bf16[512,384], index: 1, kind: input, shape index: {}]
  %s2 = inlined_call_operand.vmem [shape: f32[1,384], index: 2, kind: input, shape index: {}]
  %s3 = inlined_call_operand.hbm [shape: bf16[128,128], index: 3, kind: input, shape index: {}]
  %s4 = inlined_call_operand.vmem [shape: f32[1,128], index: 4, kind: input, shape index: {}]
  %s5 = inlined_call_operand.vmem [shape: bf16[8,128], index: 5, kind: output, shape index: {}]
  %s6 = sld [smem:[#allocation0]]
  $region38: #{lstm_classifier_forward.1} parent=0
    _
  %s8 = ssub.s32 1, %s6
  %s9 = scalar_select 0, %s8, %s6
  $region1: #{lstm_classifier_forward.1} parent=0
    #allocation2 [shape = 'u8[393216]{0}', space=vmem, size = 0x60000, scoped, tag = 'input window, operand 1, single buffered']
    #allocation3 [shape = 's32[1]{0}', space=sflag, size = 0x4, scoped, tag = 'scoped memory for lstm_classifier_forward.1']
    #allocation4 [shape = 'u8[32768]{0}', space=vmem, size = 0x8000, scoped, tag = 'input window, operand 3, single buffered']
    #allocation5 [shape = 's32[1]{0}', space=sflag, size = 0x4, scoped, tag = 'scoped memory for lstm_classifier_forward.1']
    %10 = vsyncpa [#allocation3], 0
    %11 = vsyncpa [#allocation5], 0
    // Predicated region
    $region2: #{lstm_classifier_forward.1} parent=1 // pred_check
      _
    $region3: #{lstm_classifier_forward.1} parent=1 // pred_check_branch
      %13 = sbr.rel (0) target = $region5
    $region4: #{lstm_classifier_forward.1} parent=1 // pred_region
      _
    $region5: #{lstm_classifier_forward.1} parent=1 // pred_fallthru
      _
    // Predicated region
    $region6: #{lstm_classifier_forward.1} parent=1 // pred_check
      _
    $region7: #{lstm_classifier_forward.1} parent=1 // pred_check_branch
      %15 = sbr.rel (0) target = $region9
    $region8: #{lstm_classifier_forward.1} parent=1 // pred_region
      %s17 = ssub.s32 12288, 12288
      %18 = vsyncadd [#allocation3], %s17
      %s19 = sshll.u32 [#allocation2], 4
      %s20 = int_to_ptr.vmem [resolvable:$true] %s19
      %25 = dma.hbm_to_vmem [thread:$0]  %s1, 12288, %s20, [#allocation3], 192, 192, 12
    $region9: #{lstm_classifier_forward.1} parent=1 // pred_fallthru
      _
    // Predicated region
    $region10: #{lstm_classifier_forward.1} parent=1 // pred_check
      _
    $region11: #{lstm_classifier_forward.1} parent=1 // pred_check_branch
      %27 = sbr.rel (0) target = $region13
    $region12: #{lstm_classifier_forward.1} parent=1 // pred_region
      _
    $region13: #{lstm_classifier_forward.1} parent=1 // pred_fallthru
      _
    // Predicated region
    $region14: #{lstm_classifier_forward.1} parent=1 // pred_check
      _
    $region15: #{lstm_classifier_forward.1} parent=1 // pred_check_branch
      %29 = sbr.rel (0) target = $region17
    $region16: #{lstm_classifier_forward.1} parent=1 // pred_region
      %s31 = ssub.s32 1024, 1024
      %32 = vsyncadd [#allocation5], %s31
      %s33 = sshll.u32 [#allocation4], 4
      %s34 = int_to_ptr.vmem [resolvable:$true] %s33
      %39 = dma.hbm_to_vmem [thread:$0]  %s3, 1024, %s34, [#allocation5], 64, 64, 4
    $region17: #{lstm_classifier_forward.1} parent=1 // pred_fallthru
      _
    // Predicated region
    $region18: #{lstm_classifier_forward.1} parent=1 // pred_check
      _
    $region19: #{lstm_classifier_forward.1} parent=1 // pred_check_branch
      %41 = sbr.rel (0) target = $region21
    $region20: #{lstm_classifier_forward.1} parent=1 // pred_region
      _
    $region21: #{lstm_classifier_forward.1} parent=1 // pred_fallthru
      _
    // Predicated region
    $region22: #{lstm_classifier_forward.1} parent=1 // pred_check
      _
    $region23: #{lstm_classifier_forward.1} parent=1 // pred_check_branch
      %43 = sbr.rel (0) target = $region25
    $region24: #{lstm_classifier_forward.1} parent=1 // pred_region
      %44 = dma.done [#allocation3], 12288
    $region25: #{lstm_classifier_forward.1} parent=1 // pred_fallthru
      _
    // Predicated region
    $region26: #{lstm_classifier_forward.1} parent=1 // pred_check
      _
    $region27: #{lstm_classifier_forward.1} parent=1 // pred_check_branch
      %46 = sbr.rel (0) target = $region29
    $region28: #{lstm_classifier_forward.1} parent=1 // pred_region
      %47 = dma.done [#allocation5], 1024
    $region29: #{lstm_classifier_forward.1} parent=1 // pred_fallthru
      _
    %v49 = vld [vmem:[%s0] sm:$0xff]
    %v50 = vld [vmem:[%s0 + $0x8] sm:$0xff]
    %v51 = vld [vmem:[#allocation2] sm:$0xff]
    %v52 = vld [vmem:[#allocation2 + $0x8] sm:$0xf]
    %v53 = vld [vmem:[#allocation2 + $0xc] sm:$0xff]
    %v54 = vld [vmem:[#allocation2 + $0x14] sm:$0xf]
    %v55 = vld [vmem:[#allocation2 + $0x18] sm:$0xff]
    %v56 = vld [vmem:[#allocation2 + $0x20] sm:$0xf]
    %v57 = vld [vmem:[#allocation2 + $0x24] sm:$0xff]
    %v58 = vld [vmem:[#allocation2 + $0x2c] sm:$0xf]
    %v59 = vld [vmem:[#allocation2 + $0x30] sm:$0xff]
    %v60 = vld [vmem:[#allocation2 + $0x38] sm:$0xf]
    %v61 = vld [vmem:[#allocation2 + $0x3c] sm:$0xff]
    %v62 = vld [vmem:[#allocation2 + $0x44] sm:$0xf]
    %v63 = vld [vmem:[#allocation2 + $0x48] sm:$0xff]
    %v64 = vld [vmem:[#allocation2 + $0x50] sm:$0xf]
    %v65 = vld [vmem:[#allocation2 + $0x54] sm:$0xff]
    %v66 = vld [vmem:[#allocation2 + $0x5c] sm:$0xf]
    %v67 = vld [vmem:[#allocation2 + $0x60] sm:$0xff]
    %v68 = vld [vmem:[#allocation2 + $0x68] sm:$0xf]
    %v69 = vld [vmem:[#allocation2 + $0x6c] sm:$0xff]
    %v70 = vld [vmem:[#allocation2 + $0x74] sm:$0xf]
    %v71 = vld [vmem:[#allocation2 + $0x78] sm:$0xff]
    %v72 = vld [vmem:[#allocation2 + $0x80] sm:$0xf]
    %v73 = vld [vmem:[#allocation2 + $0x84] sm:$0xff]
    %v74 = vld [vmem:[#allocation2 + $0x8c] sm:$0xf]
    %v75 = vld [vmem:[#allocation2 + $0x90] sm:$0xff]
    %v76 = vld [vmem:[#allocation2 + $0x98] sm:$0xf]
    %v77 = vld [vmem:[#allocation2 + $0x9c] sm:$0xff]
    %v78 = vld [vmem:[#allocation2 + $0xa4] sm:$0xf]
    %v79 = vld [vmem:[#allocation2 + $0xa8] sm:$0xff]
    %v80 = vld [vmem:[#allocation2 + $0xb0] sm:$0xf]
    %v81 = vld [vmem:[#allocation2 + $0xb4] sm:$0xff]
    %v82 = vld [vmem:[#allocation2 + $0xbc] sm:$0xf]
    %v83 = vld [vmem:[#allocation2 + $0xc0] sm:$0xff]
    %v84 = vld [vmem:[#allocation2 + $0xc8] sm:$0xf]
    %v85 = vld [vmem:[#allocation2 + $0xcc] sm:$0xff]
    %v86 = vld [vmem:[#allocation2 + $0xd4] sm:$0xf]
    %v87 = vld [vmem:[#allocation2 + $0xd8] sm:$0xff]
    %v88 = vld [vmem:[#allocation2 + $0xe0] sm:$0xf]
    %v89 = vld [vmem:[#allocation2 + $0xe4] sm:$0xff]
    %v90 = vld [vmem:[#allocation2 + $0xec] sm:$0xf]
    %v91 = vld [vmem:[#allocation2 + $0xf0] sm:$0xff]
    %v92 = vld [vmem:[#allocation2 + $0xf8] sm:$0xf]
    %v93 = vld [vmem:[#allocation2 + $0xfc] sm:$0xff]
    %v94 = vld [vmem:[#allocation2 + $0x104] sm:$0xf]
    %v95 = vld [vmem:[#allocation2 + $0x108] sm:$0xff]
    %v96 = vld [vmem:[#allocation2 + $0x110] sm:$0xf]
    %v97 = vld [vmem:[#allocation2 + $0x114] sm:$0xff]
    %v98 = vld [vmem:[#allocation2 + $0x11c] sm:$0xf]
    %v99 = vld [vmem:[#allocation2 + $0x120] sm:$0xff]
    %v100 = vld [vmem:[#allocation2 + $0x128] sm:$0xf]
    %v101 = vld [vmem:[#allocation2 + $0x12c] sm:$0xff]
    %v102 = vld [vmem:[#allocation2 + $0x134] sm:$0xf]
    %v103 = vld [vmem:[#allocation2 + $0x138] sm:$0xff]
    %v104 = vld [vmem:[#allocation2 + $0x140] sm:$0xf]
    %v105 = vld [vmem:[#allocation2 + $0x144] sm:$0xff]
    %v106 = vld [vmem:[#allocation2 + $0x14c] sm:$0xf]
    %v107 = vld [vmem:[#allocation2 + $0x150] sm:$0xff]
    %v108 = vld [vmem:[#allocation2 + $0x158] sm:$0xf]
    %v109 = vld [vmem:[#allocation2 + $0x15c] sm:$0xff]
    %v110 = vld [vmem:[#allocation2 + $0x164] sm:$0xf]
    %v111 = vld [vmem:[#allocation2 + $0x168] sm:$0xff]
    %v112 = vld [vmem:[#allocation2 + $0x170] sm:$0xf]
    %v113 = vld [vmem:[#allocation2 + $0x174] sm:$0xff]
    %v114 = vld [vmem:[#allocation2 + $0x17c] sm:$0xf]
    %v115 = vld [vmem:[#allocation2 + $0x180] sm:$0xff]
    %v116 = vld [vmem:[#allocation2 + $0x188] sm:$0xf]
    %v117 = vld [vmem:[#allocation2 + $0x18c] sm:$0xff]
    %v118 = vld [vmem:[#allocation2 + $0x194] sm:$0xf]
    %v119 = vld [vmem:[#allocation2 + $0x198] sm:$0xff]
    %v120 = vld [vmem:[#allocation2 + $0x1a0] sm:$0xf]
    %v121 = vld [vmem:[#allocation2 + $0x1a4] sm:$0xff]
    %v122 = vld [vmem:[#allocation2 + $0x1ac] sm:$0xf]
    %v123 = vld [vmem:[#allocation2 + $0x1b0] sm:$0xff]
    %v124 = vld [vmem:[#allocation2 + $0x1b8] sm:$0xf]
    %v125 = vld [vmem:[#allocation2 + $0x1bc] sm:$0xff]
    %v126 = vld [vmem:[#allocation2 + $0x1c4] sm:$0xf]
    %v127 = vld [vmem:[#allocation2 + $0x1c8] sm:$0xff]
    %v128 = vld [vmem:[#allocation2 + $0x1d0] sm:$0xf]
    %v129 = vld [vmem:[#allocation2 + $0x1d4] sm:$0xff]
    %v130 = vld [vmem:[#allocation2 + $0x1dc] sm:$0xf]
    %v131 = vld [vmem:[#allocation2 + $0x1e0] sm:$0xff]
    %v132 = vld [vmem:[#allocation2 + $0x1e8] sm:$0xf]
    %v133 = vld [vmem:[#allocation2 + $0x1ec] sm:$0xff]
    %v134 = vld [vmem:[#allocation2 + $0x1f4] sm:$0xf]
    %v135 = vld [vmem:[#allocation2 + $0x1f8] sm:$0xff]
    %v136 = vld [vmem:[#allocation2 + $0x200] sm:$0xf]
    %v137 = vld [vmem:[#allocation2 + $0x204] sm:$0xff]
    %v138 = vld [vmem:[#allocation2 + $0x20c] sm:$0xf]
    %v139 = vld [vmem:[#allocation2 + $0x210] sm:$0xff]
    %v140 = vld [vmem:[#allocation2 + $0x218] sm:$0xf]
    %v141 = vld [vmem:[#allocation2 + $0x21c] sm:$0xff]
    %v142 = vld [vmem:[#allocation2 + $0x224] sm:$0xf]
    %v143 = vld [vmem:[#allocation2 + $0x228] sm:$0xff]
    %v144 = vld [vmem:[#allocation2 + $0x230] sm:$0xf]
    %v145 = vld [vmem:[#allocation2 + $0x234] sm:$0xff]
    %v146 = vld [vmem:[#allocation2 + $0x23c] sm:$0xf]
    %v147 = vld [vmem:[#allocation2 + $0x240] sm:$0xff]
    %v148 = vld [vmem:[#allocation2 + $0x248] sm:$0xf]
    %v149 = vld [vmem:[#allocation2 + $0x24c] sm:$0xff]
    %v150 = vld [vmem:[#allocation2 + $0x254] sm:$0xf]
    %v151 = vld [vmem:[#allocation2 + $0x258] sm:$0xff]
    %v152 = vld [vmem:[#allocation2 + $0x260] sm:$0xf]
    %v153 = vld [vmem:[#allocation2 + $0x264] sm:$0xff]
    %v154 = vld [vmem:[#allocation2 + $0x26c] sm:$0xf]
    %v155 = vld [vmem:[#allocation2 + $0x270] sm:$0xff]
    %v156 = vld [vmem:[#allocation2 + $0x278] sm:$0xf]
    %v157 = vld [vmem:[#allocation2 + $0x27c] sm:$0xff]
    %v158 = vld [vmem:[#allocation2 + $0x284] sm:$0xf]
    %v159 = vld [vmem:[#allocation2 + $0x288] sm:$0xff]
    %v160 = vld [vmem:[#allocation2 + $0x290] sm:$0xf]
    %v161 = vld [vmem:[#allocation2 + $0x294] sm:$0xff]
    %v162 = vld [vmem:[#allocation2 + $0x29c] sm:$0xf]
    %v163 = vld [vmem:[#allocation2 + $0x2a0] sm:$0xff]
    %v164 = vld [vmem:[#allocation2 + $0x2a8] sm:$0xf]
    %v165 = vld [vmem:[#allocation2 + $0x2ac] sm:$0xff]
    %v166 = vld [vmem:[#allocation2 + $0x2b4] sm:$0xf]
    %v167 = vld [vmem:[#allocation2 + $0x2b8] sm:$0xff]
    %v168 = vld [vmem:[#allocation2 + $0x2c0] sm:$0xf]
    %v169 = vld [vmem:[#allocation2 + $0x2c4] sm:$0xff]
    %v170 = vld [vmem:[#allocation2 + $0x2cc] sm:$0xf]
    %v171 = vld [vmem:[#allocation2 + $0x2d0] sm:$0xff]
    %v172 = vld [vmem:[#allocation2 + $0x2d8] sm:$0xf]
    %v173 = vld [vmem:[#allocation2 + $0x2dc] sm:$0xff]
    %v174 = vld [vmem:[#allocation2 + $0x2e4] sm:$0xf]
    %v175 = vld [vmem:[#allocation2 + $0x2e8] sm:$0xff]
    %v176 = vld [vmem:[#allocation2 + $0x2f0] sm:$0xf]
    %v177 = vld [vmem:[#allocation2 + $0x2f4] sm:$0xff]
    %v178 = vld [vmem:[#allocation2 + $0x2fc] sm:$0xf]
    %v179 = vld [vmem:[%s2] sm:$0x7]
    %v181 = vlaneseq
    %v182 = vshrl.u32 %v181, 7
    %v183 = vsub.s32 0, %v182
    %v184 = vrot.slane %v179, %v183
    %v185 = vlaneseq
    %v186 = vshrl.u32 %v185, 7
    %v187 = vsub.s32 1, %v186
    %v188 = vrot.slane %v179, %v187
    %v189 = vlaneseq
    %v190 = vshrl.u32 %v189, 7
    %v191 = vsub.s32 2, %v190
    %v192 = vrot.slane %v179, %v191
    %v198 = vunpack.c.l.b16 %v49
    %v199 = vunpack.c.h.b16 %v49
    %v200 = vunpack.c.l.b16 %v50
    %v201 = vunpack.c.h.b16 %v50
    %v202 = vpack.c.b16 %v198, %v198
    %v203 = vpack.c.b16 %v199, %v199
    %v204 = vpack.c.b16 %v200, %v200
    %v205 = vpack.c.b16 %v201, %v201
    %v338 = vunpack.c.l.b16 %v51
    %v339 = vunpack.c.h.b16 %v51
    %v340 = vunpack.c.l.b16 %v52
    %v341 = vunpack.c.l.b16 %v53
    %v342 = vunpack.c.h.b16 %v53
    %v343 = vunpack.c.l.b16 %v54
    %v344 = vunpack.c.l.b16 %v55
    %v345 = vunpack.c.h.b16 %v55
    %v346 = vunpack.c.l.b16 %v56
    %v347 = vunpack.c.l.b16 %v57
    %v348 = vunpack.c.h.b16 %v57
    %v349 = vunpack.c.l.b16 %v58
    %v350 = vunpack.c.l.b16 %v59
    %v351 = vunpack.c.h.b16 %v59
    %v352 = vunpack.c.l.b16 %v60
    %v353 = vunpack.c.l.b16 %v61
    %v354 = vunpack.c.h.b16 %v61
    %v355 = vunpack.c.l.b16 %v62
    %v356 = vunpack.c.l.b16 %v63
    %v357 = vunpack.c.h.b16 %v63
    %v358 = vunpack.c.l.b16 %v64
    %v359 = vunpack.c.l.b16 %v65
    %v360 = vunpack.c.h.b16 %v65
    %v361 = vunpack.c.l.b16 %v66
    %v362 = vunpack.c.l.b16 %v67
    %v363 = vunpack.c.h.b16 %v67
    %v364 = vunpack.c.l.b16 %v68
    %v365 = vunpack.c.l.b16 %v69
    %v366 = vunpack.c.h.b16 %v69
    %v367 = vunpack.c.l.b16 %v70
    %v368 = vunpack.c.l.b16 %v71
    %v369 = vunpack.c.h.b16 %v71
    %v370 = vunpack.c.l.b16 %v72
    %v371 = vunpack.c.l.b16 %v73
    %v372 = vunpack.c.h.b16 %v73
    %v373 = vunpack.c.l.b16 %v74
    %v374 = vunpack.c.l.b16 %v75
    %v375 = vunpack.c.h.b16 %v75
    %v376 = vunpack.c.l.b16 %v76
    %v377 = vunpack.c.l.b16 %v77
    %v378 = vunpack.c.h.b16 %v77
    %v379 = vunpack.c.l.b16 %v78
    %v380 = vunpack.c.l.b16 %v79
    %v381 = vunpack.c.h.b16 %v79
    %v382 = vunpack.c.l.b16 %v80
    %v383 = vunpack.c.l.b16 %v81
    %v384 = vunpack.c.h.b16 %v81
    %v385 = vunpack.c.l.b16 %v82
    %v386 = vunpack.c.l.b16 %v83
    %v387 = vunpack.c.h.b16 %v83
    %v388 = vunpack.c.l.b16 %v84
    %v389 = vunpack.c.l.b16 %v85
    %v390 = vunpack.c.h.b16 %v85
    %v391 = vunpack.c.l.b16 %v86
    %v392 = vunpack.c.l.b16 %v87
    %v393 = vunpack.c.h.b16 %v87
    %v394 = vunpack.c.l.b16 %v88
    %v395 = vunpack.c.l.b16 %v89
    %v396 = vunpack.c.h.b16 %v89
    %v397 = vunpack.c.l.b16 %v90
    %v398 = vunpack.c.l.b16 %v91
    %v399 = vunpack.c.h.b16 %v91
    %v400 = vunpack.c.l.b16 %v92
    %v401 = vunpack.c.l.b16 %v93
    %v402 = vunpack.c.h.b16 %v93
    %v403 = vunpack.c.l.b16 %v94
    %v404 = vunpack.c.l.b16 %v95
    %v405 = vunpack.c.h.b16 %v95
    %v406 = vunpack.c.l.b16 %v96
    %v407 = vunpack.c.l.b16 %v97
    %v408 = vunpack.c.h.b16 %v97
    %v409 = vunpack.c.l.b16 %v98
    %v410 = vunpack.c.l.b16 %v99
    %v411 = vunpack.c.h.b16 %v99
    %v412 = vunpack.c.l.b16 %v100
    %v413 = vunpack.c.l.b16 %v101
    %v414 = vunpack.c.h.b16 %v101
    %v415 = vunpack.c.l.b16 %v102
    %v416 = vunpack.c.l.b16 %v103
    %v417 = vunpack.c.h.b16 %v103
    %v418 = vunpack.c.l.b16 %v104
    %v419 = vunpack.c.l.b16 %v105
    %v420 = vunpack.c.h.b16 %v105
    %v421 = vunpack.c.l.b16 %v106
    %v422 = vunpack.c.l.b16 %v107
    %v423 = vunpack.c.h.b16 %v107
    %v424 = vunpack.c.l.b16 %v108
    %v425 = vunpack.c.l.b16 %v109
    %v426 = vunpack.c.h.b16 %v109
    %v427 = vunpack.c.l.b16 %v110
    %v428 = vunpack.c.l.b16 %v111
    %v429 = vunpack.c.h.b16 %v111
    %v430 = vunpack.c.l.b16 %v112
    %v431 = vunpack.c.l.b16 %v113
    %v432 = vunpack.c.h.b16 %v113
    %v433 = vunpack.c.l.b16 %v114
    %v434 = vunpack.c.l.b16 %v115
    %v435 = vunpack.c.h.b16 %v115
    %v436 = vunpack.c.l.b16 %v116
    %v437 = vunpack.c.l.b16 %v117
    %v438 = vunpack.c.h.b16 %v117
    %v439 = vunpack.c.l.b16 %v118
    %v440 = vunpack.c.l.b16 %v119
    %v441 = vunpack.c.h.b16 %v119
    %v442 = vunpack.c.l.b16 %v120
    %v443 = vunpack.c.l.b16 %v121
    %v444 = vunpack.c.h.b16 %v121
    %v445 = vunpack.c.l.b16 %v122
    %v446 = vunpack.c.l.b16 %v123
    %v447 = vunpack.c.h.b16 %v123
    %v448 = vunpack.c.l.b16 %v124
    %v449 = vunpack.c.l.b16 %v125
    %v450 = vunpack.c.h.b16 %v125
    %v451 = vunpack.c.l.b16 %v126
    %v452 = vunpack.c.l.b16 %v127
    %v453 = vunpack.c.h.b16 %v127
    %v454 = vunpack.c.l.b16 %v128
    %v455 = vunpack.c.l.b16 %v129
    %v456 = vunpack.c.h.b16 %v129
    %v457 = vunpack.c.l.b16 %v130
    %v458 = vunpack.c.l.b16 %v131
    %v459 = vunpack.c.h.b16 %v131
    %v460 = vunpack.c.l.b16 %v132
    %v461 = vunpack.c.l.b16 %v133
    %v462 = vunpack.c.h.b16 %v133
    %v463 = vunpack.c.l.b16 %v134
    %v464 = vunpack.c.l.b16 %v135
    %v465 = vunpack.c.h.b16 %v135
    %v466 = vunpack.c.l.b16 %v136
    %v467 = vunpack.c.l.b16 %v137
    %v468 = vunpack.c.h.b16 %v137
    %v469 = vunpack.c.l.b16 %v138
    %v470 = vunpack.c.l.b16 %v139
    %v471 = vunpack.c.h.b16 %v139
    %v472 = vunpack.c.l.b16 %v140
    %v473 = vunpack.c.l.b16 %v141
    %v474 = vunpack.c.h.b16 %v141
    %v475 = vunpack.c.l.b16 %v142
    %v476 = vunpack.c.l.b16 %v143
    %v477 = vunpack.c.h.b16 %v143
    %v478 = vunpack.c.l.b16 %v144
    %v479 = vunpack.c.l.b16 %v145
    %v480 = vunpack.c.h.b16 %v145
    %v481 = vunpack.c.l.b16 %v146
    %v482 = vunpack.c.l.b16 %v147
    %v483 = vunpack.c.h.b16 %v147
    %v484 = vunpack.c.l.b16 %v148
    %v485 = vunpack.c.l.b16 %v149
    %v486 = vunpack.c.h.b16 %v149
    %v487 = vunpack.c.l.b16 %v150
    %v488 = vunpack.c.l.b16 %v151
    %v489 = vunpack.c.h.b16 %v151
    %v490 = vunpack.c.l.b16 %v152
    %v491 = vunpack.c.l.b16 %v153
    %v492 = vunpack.c.h.b16 %v153
    %v493 = vunpack.c.l.b16 %v154
    %v494 = vunpack.c.l.b16 %v155
    %v495 = vunpack.c.h.b16 %v155
    %v496 = vunpack.c.l.b16 %v156
    %v497 = vunpack.c.l.b16 %v157
    %v498 = vunpack.c.h.b16 %v157
    %v499 = vunpack.c.l.b16 %v158
    %v500 = vunpack.c.l.b16 %v159
    %v501 = vunpack.c.h.b16 %v159
    %v502 = vunpack.c.l.b16 %v160
    %v503 = vunpack.c.l.b16 %v161
    %v504 = vunpack.c.h.b16 %v161
    %v505 = vunpack.c.l.b16 %v162
    %v506 = vunpack.c.l.b16 %v163
    %v507 = vunpack.c.h.b16 %v163
    %v508 = vunpack.c.l.b16 %v164
    %v509 = vunpack.c.l.b16 %v165
    %v510 = vunpack.c.h.b16 %v165
    %v511 = vunpack.c.l.b16 %v166
    %v512 = vunpack.c.l.b16 %v167
    %v513 = vunpack.c.h.b16 %v167
    %v514 = vunpack.c.l.b16 %v168
    %v515 = vunpack.c.l.b16 %v169
    %v516 = vunpack.c.h.b16 %v169
    %v517 = vunpack.c.l.b16 %v170
    %v518 = vunpack.c.l.b16 %v171
    %v519 = vunpack.c.h.b16 %v171
    %v520 = vunpack.c.l.b16 %v172
    %v521 = vunpack.c.l.b16 %v173
    %v522 = vunpack.c.h.b16 %v173
    %v523 = vunpack.c.l.b16 %v174
    %v524 = vunpack.c.l.b16 %v175
    %v525 = vunpack.c.h.b16 %v175
    %v526 = vunpack.c.l.b16 %v176
    %v527 = vunpack.c.l.b16 %v177
    %v528 = vunpack.c.h.b16 %v177
    %v529 = vunpack.c.l.b16 %v178
    %v530 = vpack.c.b16 %v341, %v338
    %v531 = vpack.c.b16 %v342, %v339
    %v532 = vpack.c.b16 %v343, %v340
    %v533 = vpack.c.b16 %v347, %v344
    %v534 = vpack.c.b16 %v348, %v345
    %v535 = vpack.c.b16 %v349, %v346
    %v536 = vpack.c.b16 %v353, %v350
    %v537 = vpack.c.b16 %v354, %v351
    %v538 = vpack.c.b16 %v355, %v352
    %v539 = vpack.c.b16 %v359, %v356
    %v540 = vpack.c.b16 %v360, %v357
    %v541 = vpack.c.b16 %v361, %v358
    %v542 = vpack.c.b16 %v365, %v362
    %v543 = vpack.c.b16 %v366, %v363
    %v544 = vpack.c.b16 %v367, %v364
    %v545 = vpack.c.b16 %v371, %v368
    %v546 = vpack.c.b16 %v372, %v369
    %v547 = vpack.c.b16 %v373, %v370
    %v548 = vpack.c.b16 %v377, %v374
    %v549 = vpack.c.b16 %v378, %v375
    %v550 = vpack.c.b16 %v379, %v376
    %v551 = vpack.c.b16 %v383, %v380
    %v552 = vpack.c.b16 %v384, %v381
    %v553 = vpack.c.b16 %v385, %v382
    %v554 = vpack.c.b16 %v389, %v386
    %v555 = vpack.c.b16 %v390, %v387
    %v556 = vpack.c.b16 %v391, %v388
    %v557 = vpack.c.b16 %v395, %v392
    %v558 = vpack.c.b16 %v396, %v393
    %v559 = vpack.c.b16 %v397, %v394
    %v560 = vpack.c.b16 %v401, %v398
    %v561 = vpack.c.b16 %v402, %v399
    %v562 = vpack.c.b16 %v403, %v400
    %v563 = vpack.c.b16 %v407, %v404
    %v564 = vpack.c.b16 %v408, %v405
    %v565 = vpack.c.b16 %v409, %v406
    %v566 = vpack.c.b16 %v413, %v410
    %v567 = vpack.c.b16 %v414, %v411
    %v568 = vpack.c.b16 %v415, %v412
    %v569 = vpack.c.b16 %v419, %v416
    %v570 = vpack.c.b16 %v420, %v417
    %v571 = vpack.c.b16 %v421, %v418
    %v572 = vpack.c.b16 %v425, %v422
    %v573 = vpack.c.b16 %v426, %v423
    %v574 = vpack.c.b16 %v427, %v424
    %v575 = vpack.c.b16 %v431, %v428
    %v576 = vpack.c.b16 %v432, %v429
    %v577 = vpack.c.b16 %v433, %v430
    %v578 = vpack.c.b16 %v437, %v434
    %v579 = vpack.c.b16 %v438, %v435
    %v580 = vpack.c.b16 %v439, %v436
    %v581 = vpack.c.b16 %v443, %v440
    %v582 = vpack.c.b16 %v444, %v441
    %v583 = vpack.c.b16 %v445, %v442
    %v584 = vpack.c.b16 %v449, %v446
    %v585 = vpack.c.b16 %v450, %v447
    %v586 = vpack.c.b16 %v451, %v448
    %v587 = vpack.c.b16 %v455, %v452
    %v588 = vpack.c.b16 %v456, %v453
    %v589 = vpack.c.b16 %v457, %v454
    %v590 = vpack.c.b16 %v461, %v458
    %v591 = vpack.c.b16 %v462, %v459
    %v592 = vpack.c.b16 %v463, %v460
    %v593 = vpack.c.b16 %v467, %v464
    %v594 = vpack.c.b16 %v468, %v465
    %v595 = vpack.c.b16 %v469, %v466
    %v596 = vpack.c.b16 %v473, %v470
    %v597 = vpack.c.b16 %v474, %v471
    %v598 = vpack.c.b16 %v475, %v472
    %v599 = vpack.c.b16 %v479, %v476
    %v600 = vpack.c.b16 %v480, %v477
    %v601 = vpack.c.b16 %v481, %v478
    %v602 = vpack.c.b16 %v485, %v482
    %v603 = vpack.c.b16 %v486, %v483
    %v604 = vpack.c.b16 %v487, %v484
    %v605 = vpack.c.b16 %v491, %v488
    %v606 = vpack.c.b16 %v492, %v489
    %v607 = vpack.c.b16 %v493, %v490
    %v608 = vpack.c.b16 %v497, %v494
    %v609 = vpack.c.b16 %v498, %v495
    %v610 = vpack.c.b16 %v499, %v496
    %v611 = vpack.c.b16 %v503, %v500
    %v612 = vpack.c.b16 %v504, %v501
    %v613 = vpack.c.b16 %v505, %v502
    %v614 = vpack.c.b16 %v509, %v506
    %v615 = vpack.c.b16 %v510, %v507
    %v616 = vpack.c.b16 %v511, %v508
    %v617 = vpack.c.b16 %v515, %v512
    %v618 = vpack.c.b16 %v516, %v513
    %v619 = vpack.c.b16 %v517, %v514
    %v620 = vpack.c.b16 %v521, %v518
    %v621 = vpack.c.b16 %v522, %v519
    %v622 = vpack.c.b16 %v523, %v520
    %v623 = vpack.c.b16 %v527, %v524
    %v624 = vpack.c.b16 %v528, %v525
    %v625 = vpack.c.b16 %v529, %v526
    %722 = vmatprep.subr.bf16.mxu0 %v552
    %723 = vmatpush1.bf16.msra.mxu0 %v551
    %724 = vmatprep.subr.bf16.mxu0 %v549
    %725 = vmatpush1.bf16.msra.mxu0 %v548
    %726 = vmatprep.subr.bf16.mxu0 %v546
    %727 = vmatpush1.bf16.msra.mxu0 %v545
    %728 = vmatprep.subr.bf16.mxu0 %v543
    %729 = vmatpush1.bf16.msra.mxu0 %v542
    %730 = vmatprep.subr.bf16.mxu0 %v540
    %731 = vmatpush1.bf16.msra.mxu0 %v539
    %732 = vmatprep.subr.bf16.mxu0 %v537
    %733 = vmatpush1.bf16.msra.mxu0 %v536
    %734 = vmatprep.subr.bf16.mxu0 %v534
    %735 = vmatpush1.bf16.msra.mxu0 %v533
    %736 = vmatprep.subr.bf16.mxu0 %v531
    %737 = vmatpush1.bf16.msra.mxu0 %v530
    %738 = vmatprep.subr.bf16.mxu0 %v576
    %739 = vmatpush2.bf16.msra.mxu0 %v575
    %740 = vmatprep.subr.bf16.mxu0 %v573
    %741 = vmatpush2.bf16.msra.mxu0 %v572
    %742 = vmatprep.subr.bf16.mxu0 %v570
    %743 = vmatpush2.bf16.msra.mxu0 %v569
    %744 = vmatprep.subr.bf16.mxu0 %v567
    %745 = vmatpush2.bf16.msra.mxu0 %v566
    %746 = vmatprep.subr.bf16.mxu0 %v564
    %747 = vmatpush2.bf16.msra.mxu0 %v563
    %748 = vmatprep.subr.bf16.mxu0 %v561
    %749 = vmatpush2.bf16.msra.mxu0 %v560
    %750 = vmatprep.subr.bf16.mxu0 %v558
    %751 = vmatpush2.bf16.msra.mxu0 %v557
    %752 = vmatprep.subr.bf16.mxu0 %v555
    %753 = vmatpush2.bf16.msra.mxu0 %v554
    %754 = vmatprep.mubr.bf16.mxu0 %v203
    %755 = vmatmul.mubr.bf16.gmra.mxu0 %v202
    %v756 = vpop.f32.mrf.mxu0
    %v757 = vadd.f32 %v184, %v756
    %v758 = vpop.f32.mrf.mxu0
    %v759 = vadd.f32 %v188, %v758
    %v760 = vpop.f32.mrf.mxu0
    %v761 = vpop.f32.mrf.mxu0
    %762 = vdwg.mxu0
    %763 = vmatprep.subr.bf16.mxu0 %v600
    %764 = vmatpush1.bf16.msra.mxu0 %v599
    %765 = vmatprep.subr.bf16.mxu0 %v597
    %766 = vmatpush1.bf16.msra.mxu0 %v596
    %767 = vmatprep.subr.bf16.mxu0 %v594
    %768 = vmatpush1.bf16.msra.mxu0 %v593
    %769 = vmatprep.subr.bf16.mxu0 %v591
    %770 = vmatpush1.bf16.msra.mxu0 %v590
    %771 = vmatprep.subr.bf16.mxu0 %v588
    %772 = vmatpush1.bf16.msra.mxu0 %v587
    %773 = vmatprep.subr.bf16.mxu0 %v585
    %774 = vmatpush1.bf16.msra.mxu0 %v584
    %775 = vmatprep.subr.bf16.mxu0 %v582
    %776 = vmatpush1.bf16.msra.mxu0 %v581
    %777 = vmatprep.subr.bf16.mxu0 %v579
    %778 = vmatpush1.bf16.msra.mxu0 %v578
    %779 = vmatprep.subr.bf16.mxu0 %v624
    %780 = vmatpush2.bf16.msra.mxu0 %v623
    %781 = vmatprep.subr.bf16.mxu0 %v621
    %782 = vmatpush2.bf16.msra.mxu0 %v620
    %783 = vmatprep.subr.bf16.mxu0 %v618
    %784 = vmatpush2.bf16.msra.mxu0 %v617
    %785 = vmatprep.subr.bf16.mxu0 %v615
    %786 = vmatpush2.bf16.msra.mxu0 %v614
    %787 = vmatprep.subr.bf16.mxu0 %v612
    %788 = vmatpush2.bf16.msra.mxu0 %v611
    %789 = vmatprep.subr.bf16.mxu0 %v609
    %790 = vmatpush2.bf16.msra.mxu0 %v608
    %791 = vmatprep.subr.bf16.mxu0 %v606
    %792 = vmatpush2.bf16.msra.mxu0 %v605
    %793 = vmatprep.subr.bf16.mxu0 %v603
    %794 = vmatpush2.bf16.msra.mxu0 %v602
    %795 = vmatprep.mubr.bf16.mxu0 %v205
    %796 = vmatmul.mubr.bf16.gmra.mxu0 %v204
    %v797 = vpop.f32.mrf.mxu0
    %v798 = vadd.f32 %v757, %v797
    %v799 = vpop.f32.mrf.mxu0
    %v800 = vadd.f32 %v759, %v799
    %v801 = vpop.f32.mrf.mxu0
    %v802 = vpop.f32.mrf.mxu0
    %803 = vdwg.mxu0
    %804 = vmatprep.subr.bf16.mxu0 0
    %805 = vmatpush1.bf16.msra.mxu0 %v553
    %806 = vmatprep.subr.bf16.mxu0 0
    %807 = vmatpush1.bf16.msra.mxu0 %v550
    %808 = vmatprep.subr.bf16.mxu0 0
    %809 = vmatpush1.bf16.msra.mxu0 %v547
    %810 = vmatprep.subr.bf16.mxu0 0
    %811 = vmatpush1.bf16.msra.mxu0 %v544
    %812 = vmatprep.subr.bf16.mxu0 0
    %813 = vmatpush1.bf16.msra.mxu0 %v541
    %814 = vmatprep.subr.bf16.mxu0 0
    %815 = vmatpush1.bf16.msra.mxu0 %v538
    %816 = vmatprep.subr.bf16.mxu0 0
    %817 = vmatpush1.bf16.msra.mxu0 %v535
    %818 = vmatprep.subr.bf16.mxu0 0
    %819 = vmatpush1.bf16.msra.mxu0 %v532
    %820 = vmatprep.subr.bf16.mxu0 0
    %821 = vmatpush2.bf16.msra.mxu0 %v577
    %822 = vmatprep.subr.bf16.mxu0 0
    %823 = vmatpush2.bf16.msra.mxu0 %v574
    %824 = vmatprep.subr.bf16.mxu0 0
    %825 = vmatpush2.bf16.msra.mxu0 %v571
    %826 = vmatprep.subr.bf16.mxu0 0
    %827 = vmatpush2.bf16.msra.mxu0 %v568
    %828 = vmatprep.subr.bf16.mxu0 0
    %829 = vmatpush2.bf16.msra.mxu0 %v565
    %830 = vmatprep.subr.bf16.mxu0 0
    %831 = vmatpush2.bf16.msra.mxu0 %v562
    %832 = vmatprep.subr.bf16.mxu0 0
    %833 = vmatpush2.bf16.msra.mxu0 %v559
    %834 = vmatprep.subr.bf16.mxu0 0
    %835 = vmatpush2.bf16.msra.mxu0 %v556
    %836 = vmatprep.mubr.bf16.mxu0 %v203
    %837 = vmatmul.mubr.bf16.gmra.mxu0 %v202
    %v838 = vpop.f32.mrf.mxu0
    %v839 = vadd.f32 %v192, %v838
    %v840 = vpop.f32.mrf.mxu0
    %v841 = vpop.f32.mrf.mxu0
    %v842 = vpop.f32.mrf.mxu0
    %843 = vdwg.mxu0
    %844 = vmatprep.subr.bf16.mxu0 0
    %845 = vmatpush1.bf16.msra.mxu0 %v601
    %846 = vmatprep.subr.bf16.mxu0 0
    %847 = vmatpush1.bf16.msra.mxu0 %v598
    %848 = vmatprep.subr.bf16.mxu0 0
    %849 = vmatpush1.bf16.msra.mxu0 %v595
    %850 = vmatprep.subr.bf16.mxu0 0
    %851 = vmatpush1.bf16.msra.mxu0 %v592
    %852 = vmatprep.subr.bf16.mxu0 0
    %853 = vmatpush1.bf16.msra.mxu0 %v589
    %854 = vmatprep.subr.bf16.mxu0 0
    %855 = vmatpush1.bf16.msra.mxu0 %v586
    %856 = vmatprep.subr.bf16.mxu0 0
    %857 = vmatpush1.bf16.msra.mxu0 %v583
    %858 = vmatprep.subr.bf16.mxu0 0
    %859 = vmatpush1.bf16.msra.mxu0 %v580
    %860 = vmatprep.subr.bf16.mxu0 0
    %861 = vmatpush2.bf16.msra.mxu0 %v625
    %862 = vmatprep.subr.bf16.mxu0 0
    %863 = vmatpush2.bf16.msra.mxu0 %v622
    %864 = vmatprep.subr.bf16.mxu0 0
    %865 = vmatpush2.bf16.msra.mxu0 %v619
    %866 = vmatprep.subr.bf16.mxu0 0
    %867 = vmatpush2.bf16.msra.mxu0 %v616
    %868 = vmatprep.subr.bf16.mxu0 0
    %869 = vmatpush2.bf16.msra.mxu0 %v613
    %870 = vmatprep.subr.bf16.mxu0 0
    %871 = vmatpush2.bf16.msra.mxu0 %v610
    %872 = vmatprep.subr.bf16.mxu0 0
    %873 = vmatpush2.bf16.msra.mxu0 %v607
    %874 = vmatprep.subr.bf16.mxu0 0
    %875 = vmatpush2.bf16.msra.mxu0 %v604
    %876 = vmatprep.mubr.bf16.mxu0 %v205
    %877 = vmatmul.mubr.bf16.gmra.mxu0 %v204
    %v878 = vpop.f32.mrf.mxu0
    %v879 = vadd.f32 %v839, %v878
    %v880 = vpop.f32.mrf.mxu0
    %v881 = vpop.f32.mrf.mxu0
    %v882 = vpop.f32.mrf.mxu0
    %883 = vdwg.mxu0
    %v884 = vmul.f32 %v798, 0.5
    %v885 = vtanh.pop %v884
    %v886 = vadd.f32 %v885, 1.0
    %v887 = vmul.f32 %v886, 0.5
    %v888 = vtanh.pop %v800
    %v889 = vmul.f32 %v879, 0.5
    %v890 = vtanh.pop %v889
    %v891 = vadd.f32 %v890, 1.0
    %v892 = vmul.f32 %v891, 0.5
    %v893 = vmul.f32 %v887, %v888
    %v894 = vtanh.pop %v893
    %v895 = vmul.f32 %v892, %v894
    %v896 = vpack.c.bf16 %v895, %v895
    %v897 = vld [vmem:[#allocation4] sm:$0xf]
    %v898 = vld [vmem:[#allocation4 + $0x4] sm:$0xf]
    %v899 = vld [vmem:[#allocation4 + $0x8] sm:$0xf]
    %v900 = vld [vmem:[#allocation4 + $0xc] sm:$0xf]
    %v901 = vld [vmem:[#allocation4 + $0x10] sm:$0xf]
    %v902 = vld [vmem:[#allocation4 + $0x14] sm:$0xf]
    %v903 = vld [vmem:[#allocation4 + $0x18] sm:$0xf]
    %v904 = vld [vmem:[#allocation4 + $0x1c] sm:$0xf]
    %v905 = vld [vmem:[#allocation4 + $0x20] sm:$0xf]
    %v906 = vld [vmem:[#allocation4 + $0x24] sm:$0xf]
    %v907 = vld [vmem:[#allocation4 + $0x28] sm:$0xf]
    %v908 = vld [vmem:[#allocation4 + $0x2c] sm:$0xf]
    %v909 = vld [vmem:[#allocation4 + $0x30] sm:$0xf]
    %v910 = vld [vmem:[#allocation4 + $0x34] sm:$0xf]
    %v911 = vld [vmem:[#allocation4 + $0x38] sm:$0xf]
    %v912 = vld [vmem:[#allocation4 + $0x3c] sm:$0xf]
    %v913 = vld [vmem:[%s4] sm:$0x1]
    %v915 = vlaneseq
    %v916 = vshrl.u32 %v915, 7
    %v917 = vsub.s32 0, %v916
    %v918 = vrot.slane %v913, %v917
    %v936 = vunpack.c.l.b16 %v897
    %v937 = vunpack.c.l.b16 %v898
    %v938 = vunpack.c.l.b16 %v899
    %v939 = vunpack.c.l.b16 %v900
    %v940 = vunpack.c.l.b16 %v901
    %v941 = vunpack.c.l.b16 %v902
    %v942 = vunpack.c.l.b16 %v903
    %v943 = vunpack.c.l.b16 %v904
    %v944 = vunpack.c.l.b16 %v905
    %v945 = vunpack.c.l.b16 %v906
    %v946 = vunpack.c.l.b16 %v907
    %v947 = vunpack.c.l.b16 %v908
    %v948 = vunpack.c.l.b16 %v909
    %v949 = vunpack.c.l.b16 %v910
    %v950 = vunpack.c.l.b16 %v911
    %v951 = vunpack.c.l.b16 %v912
    %v952 = vpack.c.b16 %v937, %v936
    %v953 = vpack.c.b16 %v939, %v938
    %v954 = vpack.c.b16 %v941, %v940
    %v955 = vpack.c.b16 %v943, %v942
    %v956 = vpack.c.b16 %v945, %v944
    %v957 = vpack.c.b16 %v947, %v946
    %v958 = vpack.c.b16 %v949, %v948
    %v959 = vpack.c.b16 %v951, %v950
    %968 = vmatprep.subr.bf16.mxu0 0
    %969 = vmatpush1.bf16.msra.mxu0 %v959
    %970 = vmatprep.subr.bf16.mxu0 0
    %971 = vmatpush1.bf16.msra.mxu0 %v958
    %972 = vmatprep.subr.bf16.mxu0 0
    %973 = vmatpush1.bf16.msra.mxu0 %v957
    %974 = vmatprep.subr.bf16.mxu0 0
    %975 = vmatpush1.bf16.msra.mxu0 %v956
    %976 = vmatprep.subr.bf16.mxu0 0
    %977 = vmatpush1.bf16.msra.mxu0 %v955
    %978 = vmatprep.subr.bf16.mxu0 0
    %979 = vmatpush1.bf16.msra.mxu0 %v954
    %980 = vmatprep.subr.bf16.mxu0 0
    %981 = vmatpush1.bf16.msra.mxu0 %v953
    %982 = vmatprep.subr.bf16.mxu0 0
    %983 = vmatpush1.bf16.msra.mxu0 %v952
    %984 = vmatprep.subr.bf16.mxu0 0
    %985 = vmatpush2.bf16.msra.mxu0 0
    %986 = vmatprep.subr.bf16.mxu0 0
    %987 = vmatpush2.bf16.msra.mxu0 0
    %988 = vmatprep.subr.bf16.mxu0 0
    %989 = vmatpush2.bf16.msra.mxu0 0
    %990 = vmatprep.subr.bf16.mxu0 0
    %991 = vmatpush2.bf16.msra.mxu0 0
    %992 = vmatprep.subr.bf16.mxu0 0
    %993 = vmatpush2.bf16.msra.mxu0 0
    %994 = vmatprep.subr.bf16.mxu0 0
    %995 = vmatpush2.bf16.msra.mxu0 0
    %996 = vmatprep.subr.bf16.mxu0 0
    %997 = vmatpush2.bf16.msra.mxu0 0
    %998 = vmatprep.subr.bf16.mxu0 0
    %999 = vmatpush2.bf16.msra.mxu0 0
    %1000 = vmatprep.mubr.bf16.mxu0 0
    %1001 = vmatmul.mubr.bf16.gmra.mxu0 %v896
    %v1002 = vpop.f32.mrf.mxu0
    %v1003 = vadd.f32 %v918, %v1002
    %v1004 = vpop.f32.mrf.mxu0
    %v1005 = vpop.f32.mrf.mxu0
    %v1006 = vpop.f32.mrf.mxu0
    %1007 = vdwg.mxu0
    %v1008 = vpack.c.bf16 %v1003, %v1003
    %1009 = vst [vmem:[%s5] sm:$0xf] %v1008
    // Predicated region
    $region30: #{lstm_classifier_forward.1} parent=1 // pred_check
      _
    $region31: #{lstm_classifier_forward.1} parent=1 // pred_check_branch
      %1011 = sbr.rel (0) target = $region33
    $region32: #{lstm_classifier_forward.1} parent=1 // pred_region
      _
    $region33: #{lstm_classifier_forward.1} parent=1 // pred_fallthru
      _
    // Predicated region
    $region34: #{lstm_classifier_forward.1} parent=1 // pred_check
      _
    $region35: #{lstm_classifier_forward.1} parent=1 // pred_check_branch
      %1013 = sbr.rel (0) target = $region37
    $region36: #{lstm_classifier_forward.1} parent=1 // pred_region
      _
    $region37: #{lstm_classifier_forward.1} parent=1 // pred_fallthru
      _
    %1014 = vsyncpa [#allocation3], 1
    %1015 = vsyncpa [#allocation5], 1

</llo_original>
